<compile_context>
chip_gen: v6e
topology: v6e:2x2x1
jax: 0.10.0
libtpu: 0.0.40
codegen_flags: <defaults>
</compile_context>

<pallas_src>
import functools

import jax
import jax.numpy as jnp
from jax.experimental import pallas as pl
from jax.experimental.pallas import tpu as pltpu

_MIB = 1024 * 1024


def _round_up(x, m):
    return (x + m - 1) // m * m


def _chip_info():
    """Returns (vmem_capacity_bytes, num_tensorcores) with safe fallbacks."""
    kind = ""
    try:
        kind = jax.devices()[0].device_kind.lower()
    except Exception:
        pass
    vmem_cap = None
    try:
        vmem_cap = int(getattr(pltpu.get_tpu_info(), "vmem_capacity_bytes"))
    except Exception:
        vmem_cap = None
    if vmem_cap is None:
        vmem_cap = 64 * _MIB if "v7" in kind else 128 * _MIB
    # 2 TensorCores per chip on v7x (and megacore parts); 1 on v5e/v6e.
    num_tc = 2 if any(s in kind for s in ("v7", "v4", "v5p")) else 1
    return vmem_cap, num_tc


def _choose_tiling(n_rows, vocab, itemsize, num_chunks, stream_budget):
    """Pick a row tile that keeps the double-buffered logits stream in budget."""
    sublane = {4: 8, 2: 16, 1: 32}.get(itemsize, 8)
    row_tile = stream_budget // (2 * vocab * itemsize)      # double-buffered stream
    row_tile = max(sublane, (row_tile // sublane) * sublane)
    row_tile = min(row_tile, 8192)   # diminishing returns past multi-MiB tiles
    # Don't tile past the per-chunk row count (avoids pure-padding tiles).
    per_chunk = _round_up(pl.cdiv(n_rows, num_chunks), sublane)
    row_tile = min(row_tile, per_chunk)
    n_pad = _round_up(n_rows, row_tile * num_chunks)
    return row_tile, n_pad


def _seq_xent_kernel(logits_ref, tgt_ref, out_ref, *,
                     row_tile, blocks_per_chunk, tgt_resident):
    c = pl.program_id(0)   # "parallel" chunk axis (maps to TCs on 2-TC parts)
    i = pl.program_id(1)   # sequential row-block axis within a chunk

    @pl.when(i == 0)
    def _():
        out_ref[...] = jnp.zeros_like(out_ref)

    x = logits_ref[...]                                   # (TR, V), model dtype

    if tgt_resident:
        # Whole target column is resident in VMEM; slice this tile's rows.
        start = pl.multiple_of((c * blocks_per_chunk + i) * row_tile, 8)
        tgt = tgt_ref[pl.ds(start, row_tile), :]          # (TR, 1), -1 => masked
    else:
        tgt = tgt_ref[...]                                # (TR, 1), -1 => masked

    # Numerically stable logsumexp over the vocab (lane) axis.  Max stays in the
    # input dtype (packed bf16 on v6e/v7x); only the exp chain is upcast to f32.
    m = jnp.max(x, axis=-1, keepdims=True)                # (TR, 1)
    lse = jnp.log(jnp.sum(jnp.exp((x - m).astype(jnp.float32)),
                          axis=-1, keepdims=True)) + m.astype(jnp.float32)

    # Target logit via masked lane reduction.  The iota is (1, V) and broadcasts
    # against the (TR, 1) target (no (TR, V) int32 temp); exactly one nonzero
    # per row, so the native-dtype sum is exact.  tgt == -1 never matches.
    vocab_ids = jax.lax.broadcasted_iota(jnp.int32, (1, x.shape[-1]), 1)
    zero = jnp.zeros((), dtype=x.dtype)
    x_tgt = jnp.sum(jnp.where(vocab_ids == tgt, x, zero),
                    axis=-1, keepdims=True).astype(jnp.float32)

    # Per-step scalar reduction straight into the resident lane-dense output
    # accumulator (one unmasked vreg add/store per step).
    out_ref[...] += jnp.sum(jnp.where(tgt >= 0, lse - x_tgt, 0.0))


def sequence_cross_entropy_loss(logits, target, length, eos_symbol_id,
                                *, num_chunks=None):
    """Pallas equivalent of SequenceCrossEntropyLoss.forward.

    logits: (B, L, V) float, target: (B, def_max_len) int, length == L.
    Returns sum_{b, t<=eos_pos(b)} -log_softmax(logits)[b,t,target[b,t]] / B.
    """
    B, L_in, V = logits.shape
    assert length == L_in, "length must equal input.size(1)"
    def_max_len = target.shape[1]

    vmem_cap, num_tc = _chip_info()
    if num_chunks is None:
        num_chunks = num_tc                       # 1 on v5e/v6e, 2 on v7x
    if vmem_cap <= 64 * _MIB:                     # v7x-class: 64 MiB VMEM
        stream_budget, vmem_limit = 12 * _MIB, 48 * _MIB
    else:                                         # v5e / v6e: 128 MiB VMEM
        stream_budget, vmem_limit = 24 * _MIB, 96 * _MIB

    # mask[i, :eos_pos+1] = 1 -- matches the PyTorch per-row loop (assumes one
    # EOS per row; a row with no EOS keeps only position 0, like argmax-of-False).
    eos_pos = jnp.argmax(target == eos_symbol_id, axis=1)                   # (B,)
    valid = jnp.arange(def_max_len)[None, :] <= eos_pos[:, None]            # (B, D)

    target = target[:, :length].astype(jnp.int32)
    valid = valid[:, :length]
    # NOTE: valid targets outside [0, V) would silently contribute `lse` (no OOB
    # check in-kernel); the PyTorch module assumes in-range ids.
    masked_tgt = jnp.where(valid, target, -1)                               # -1 => masked

    N = B * length
    flat_logits = logits.reshape(N, V)      # keep model dtype (bf16 stays bf16)
    flat_tgt = masked_tgt.reshape(N, 1)

    itemsize = jnp.dtype(flat_logits.dtype).itemsize
    row_tile, n_pad = _choose_tiling(N, V, itemsize, num_chunks, stream_budget)
    if n_pad != N:
        flat_logits = jnp.pad(flat_logits, ((0, n_pad - N), (0, 0)))
        flat_tgt = jnp.pad(flat_tgt, ((0, n_pad - N), (0, 0)), constant_values=-1)

    blocks_per_chunk = n_pad // (row_tile * num_chunks)
    grid = (num_chunks, blocks_per_chunk)

    # Keep the whole int32 target column resident in VMEM (one up-front DMA,
    # sliced in-kernel) when its lane-padded footprint is small; otherwise fall
    # back to a small per-step block.
    resident_bytes = n_pad * 128 * 4          # 1-lane column pads to 128 lanes
    tgt_resident = resident_bytes * 2 <= max(_MIB, vmem_limit // 16)
    if tgt_resident:
        tgt_spec = pl.BlockSpec((n_pad, 1), lambda c, i: (0, 0))
    else:
        tgt_spec = pl.BlockSpec((row_tile, 1),
                                lambda c, i: (c * blocks_per_chunk + i, 0))

    kernel = functools.partial(_seq_xent_kernel,
                               row_tile=row_tile,
                               blocks_per_chunk=blocks_per_chunk,
                               tgt_resident=tgt_resident)

    # TODO(synk): for LLM-scale V (>= ~32k, especially on v7x's 64 MiB VMEM) add
    # an inner "arbitrary" vocab grid axis with an online (flash-style)
    # logsumexp + running target-match so row tiles stay large.
    partials = pl.pallas_call(
        kernel,
        out_shape=jax.ShapeDtypeStruct((num_chunks, 8, 128), jnp.float32),
        grid_spec=pltpu.PrefetchScalarGridSpec(
            num_scalar_prefetch=0,
            grid=grid,
            in_specs=[
                pl.BlockSpec((row_tile, V),
                             lambda c, i: (c * blocks_per_chunk + i, 0)),
                tgt_spec,
            ],
            out_specs=pl.BlockSpec((1, 8, 128), lambda c, i: (c, 0, 0)),
        ),
        compiler_params=pltpu.CompilerParams(
            dimension_semantics=("parallel", "arbitrary"),
            vmem_limit_bytes=vmem_limit,
        ),
    )(flat_logits, flat_tgt)

    return jnp.sum(partials[:, 0, 0]) / B


def _reference(logits, target, length, eos_symbol_id):
    B, L, V = logits.shape
    def_max_len = target.shape[1]
    eos_pos = jnp.argmax(target == eos_symbol_id, axis=1)
    mask = (jnp.arange(def_max_len)[None, :] <= eos_pos[:, None]).astype(logits.dtype)
    target = target[:, :length]
    mask = mask[:, :length]
    logp = jax.nn.log_softmax(logits.reshape(-1, V).astype(jnp.float32), axis=-1)
    nll = -jnp.take_along_axis(logp, target.reshape(-1, 1), axis=1)
    return jnp.sum(nll * mask.reshape(-1, 1)) / B


if __name__ == "__main__":
    B, L, V = 2, 8, 128
    eos_id = 5

    key = jax.random.PRNGKey(0)
    k_logits, k_tgt = jax.random.split(key)
    logits = jax.random.normal(k_logits, (B, L, V), dtype=jnp.float32)

    target = jax.random.randint(k_tgt, (B, L), 0, V, dtype=jnp.int32)
    # Ensure exactly one EOS per row (matches the PyTorch module's assumption).
    target = jnp.where(target == eos_id, eos_id + 1, target)
    eos_positions = jnp.array([5, 7], dtype=jnp.int32)
    target = target.at[jnp.arange(B), eos_positions].set(eos_id)

    loss = jax.block_until_ready(
        sequence_cross_entropy_loss(logits, target, L, eos_id))
    ref = jax.block_until_ready(_reference(logits, target, L, eos_id))
    assert jnp.allclose(loss, ref, rtol=1e-5, atol=1e-5), (loss, ref)

    print("KERNEL_OK")
</pallas_src>

<mosaic_0001>
module attributes {stable_mosaic.version = 11 : i64} {
  func.func @_seq_xent_kernel(%arg0: i32, %arg1: i32, %arg2: memref<16x128xf32, #tpu.memory_space<vmem>>, %arg3: memref<16x1xi32, #tpu.memory_space<vmem>>, %arg4: memref<1x8x128xf32, #tpu.memory_space<vmem>>) attributes {dimension_semantics = [#tpu.dimension_semantics<parallel>, #tpu.dimension_semantics<arbitrary>], iteration_bounds = array<i64: 1, 1>, scalar_prefetch = 0 : i64, scratch_operands = 0 : i64, tpu.core_type = #tpu.core_type<tc>, window_params = [{transform_indices = @transform_0, window_bounds = array<i64: 16, 128>}, {pipeline_mode = #tpu.pipeline_mode<synchronous>, transform_indices = @transform_1, window_bounds = array<i64: 16, 1>}, {transform_indices = @transform_2, window_bounds = array<i64: 1, 8, 128>}]} {
    %c0_i32 = arith.constant 0 : i32
    %0 = arith.cmpi eq, %arg1, %c0_i32 : i32
    %1 = arith.extui %0 : i1 to i32
    %c0_i32_0 = arith.constant 0 : i32
    %2 = arith.cmpi ne, %1, %c0_i32_0 : i32
    scf.if %2 {
      %cst_15 = arith.constant 0.000000e+00 : f32
      %40 = vector.broadcast %cst_15 : f32 to vector<1x8x128xf32>
      %c0_16 = arith.constant 0 : index
      %c0_17 = arith.constant 0 : index
      %c0_18 = arith.constant 0 : index
      %41 = vector.load %arg4[%c0_16, %c0_17, %c0_18] : memref<1x8x128xf32, #tpu.memory_space<vmem>>, vector<1x8x128xf32>
      tpu.vector_store %arg4[%c0_16, %c0_17, %c0_18], %40 {strides = array<i32>} : memref<1x8x128xf32, #tpu.memory_space<vmem>>, vector<1x8x128xf32>,
    } else {
    }
    %c0 = arith.constant 0 : index
    %c0_1 = arith.constant 0 : index
    %3 = vector.load %arg2[%c0, %c0_1] : memref<16x128xf32, #tpu.memory_space<vmem>>, vector<16x128xf32>
    %c1_i32 = arith.constant 1 : i32
    %4 = arith.muli %arg0, %c1_i32 : i32
    %5 = arith.addi %4, %arg1 : i32
    %c16_i32 = arith.constant 16 : i32
    %6 = arith.muli %5, %c16_i32 : i32
    %7 = tpu.assume_multiple %6, 8 : i32
    %8 = arith.index_cast %7 : i32 to index
    %c0_2 = arith.constant 0 : index
    %9 = vector.load %arg3[%8, %c0_2] : memref<16x1xi32, #tpu.memory_space<vmem>>, vector<16x1xi32>
    %cst = arith.constant dense<0xFF800000> : vector<16xf32>
    %10 = vector.multi_reduction <maximumf>, %3, %cst [1] : vector<16x128xf32> to vector<16xf32>
    %11 = vector.shape_cast %10 : vector<16xf32> to vector<16x1xf32>
    %12 = vector.broadcast %11 : vector<16x1xf32> to vector<16x128xf32>
    %13 = arith.subf %3, %12 : vector<16x128xf32>
    %14 = math.exp %13 : vector<16x128xf32>
    %cst_3 = arith.constant dense<0.000000e+00> : vector<16xf32>
    %15 = vector.multi_reduction <add>, %14, %cst_3 [1] : vector<16x128xf32> to vector<16xf32>
    %16 = vector.shape_cast %15 : vector<16xf32> to vector<16x1xf32>
    %17 = math.log %16 : vector<16x1xf32>
    %18 = arith.addf %17, %11 : vector<16x1xf32>
    %19 = tpu.iota {dimensions = array<i32: 1>} : vector<1x128xi32>
    %20 = vector.broadcast %19 : vector<1x128xi32> to vector<16x128xi32>
    %21 = vector.broadcast %9 : vector<16x1xi32> to vector<16x128xi32>
    %22 = arith.cmpi eq, %20, %21 : vector<16x128xi32>
    %cst_4 = arith.constant 0.000000e+00 : f32
    %23 = vector.broadcast %cst_4 : f32 to vector<16x128xf32>
    %24 = arith.select %22, %3, %23 : vector<16x128xi1>, vector<16x128xf32>
    %cst_5 = arith.constant dense<0.000000e+00> : vector<16xf32>
    %25 = vector.multi_reduction <add>, %24, %cst_5 [1] : vector<16x128xf32> to vector<16xf32>
    %26 = vector.shape_cast %25 : vector<16xf32> to vector<16x1xf32>
    %c0_6 = arith.constant 0 : index
    %c0_7 = arith.constant 0 : index
    %c0_8 = arith.constant 0 : index
    %27 = vector.load %arg4[%c0_6, %c0_7, %c0_8] : memref<1x8x128xf32, #tpu.memory_space<vmem>>, vector<1x8x128xf32>
    %c0_i32_9 = arith.constant 0 : i32
    %28 = vector.broadcast %c0_i32_9 : i32 to vector<16x1xi32>
    %29 = arith.cmpi sge, %9, %28 : vector<16x1xi32>
    %30 = arith.subf %18, %26 : vector<16x1xf32>
    %cst_10 = arith.constant 0.000000e+00 : f32
    %31 = vector.broadcast %cst_10 : f32 to vector<16x1xf32>
    %32 = arith.select %29, %30, %31 : vector<16x1xi1>, vector<16x1xf32>
    %33 = vector.shape_cast %32 : vector<16x1xf32> to vector<1x16x1xf32>
    %cst_11 = arith.constant dense<0.000000e+00> : vector<1xf32>
    %34 = vector.multi_reduction <add>, %33, %cst_11 [1, 2] : vector<1x16x1xf32> to vector<1xf32>
    %35 = vector.shape_cast %34 : vector<1xf32> to vector<1x1x1xf32>
    %36 = vector.extract %35[0, 0, 0] : f32 from vector<1x1x1xf32>
    %37 = vector.broadcast %36 : f32 to vector<1x8x128xf32>
    %38 = arith.addf %27, %37 : vector<1x8x128xf32>
    %c0_12 = arith.constant 0 : index
    %c0_13 = arith.constant 0 : index
    %c0_14 = arith.constant 0 : index
    %39 = vector.load %arg4[%c0_12, %c0_13, %c0_14] : memref<1x8x128xf32, #tpu.memory_space<vmem>>, vector<1x8x128xf32>
    tpu.vector_store %arg4[%c0_12, %c0_13, %c0_14], %38 {strides = array<i32>} : memref<1x8x128xf32, #tpu.memory_space<vmem>>, vector<1x8x128xf32>,
    return
  }
  func.func @transform_0(%arg0: i32, %arg1: i32) -> (i32, i32) {
    %c1_i32 = arith.constant 1 : i32
    %0 = arith.muli %arg0, %c1_i32 : i32
    %1 = arith.addi %0, %arg1 : i32
    %c0_i32 = arith.constant 0 : i32
    %c0_i32_0 = arith.constant 0 : i32
    return %1, %c0_i32 : i32, i32
  }
  func.func @transform_1(%arg0: i32, %arg1: i32) -> (i32, i32) {
    %c0_i32 = arith.constant 0 : i32
    %c0_i32_0 = arith.constant 0 : i32
    %c0_i32_1 = arith.constant 0 : i32
    return %c0_i32, %c0_i32_0 : i32, i32
  }
  func.func @transform_2(%arg0: i32, %arg1: i32) -> (i32, i32, i32) {
    %c0_i32 = arith.constant 0 : i32
    %c0_i32_0 = arith.constant 0 : i32
    %c0_i32_1 = arith.constant 0 : i32
    return %arg0, %c0_i32, %c0_i32_0 : i32, i32, i32
  }
}

</mosaic_0001>

<llo_original>
// kernel: tpu_custom_call.1
$region0: #{tpu_custom_call.1}
  #allocation0 [shape = 'u32[]', space=smem, size = 0x4, offset = 0x4, fixed_abs, tag = 'smem constant byte address 0x4 - core index']
  #allocation1 [shape = 'u32[144,128]{1,0:T(1,128)}', space=vmem, size = 0x12000, scoped, tag = 'internal scratch']
  %s0 = inlined_call_operand.vmem [shape: f32[16,128], index: 0, kind: input, shape index: {}]
  %s1 = inlined_call_operand.vmem [shape: s32[16,1], index: 1, kind: input, shape index: {}]
  %s2 = inlined_call_operand.hbm [shape: f32[1,8,128], index: 2, kind: output, shape index: {}]
  %s3 = sld [smem:[#allocation0]]
  $region22: #{tpu_custom_call.1} parent=0
    _
  %s5 = ssub.s32 1, %s3
  %s6 = scalar_select 0, %s5, %s3
  $region1: #{tpu_custom_call.1} parent=0
    #allocation2 [shape = 'u8[4096]{0}', space=vmem, size = 0x1000, scoped, tag = 'output window, operand 0, single buffered']
    #allocation3 [shape = 's32[1]{0}', space=sflag, size = 0x4, scoped, tag = 'scoped memory for tpu_custom_call.1']
    %7 = vsyncpa [#allocation3], 0
    // Predicated region
    $region2: #{tpu_custom_call.1} parent=1 // pred_check
      _
    $region3: #{tpu_custom_call.1} parent=1 // pred_check_branch
      %9 = sbr.rel (0) target = $region5
    $region4: #{tpu_custom_call.1} parent=1 // pred_region
      %s10 = sadd.s32 0, 0
      %s11 = smul.u32 2, %s10
      %p12 = scmp.lt.s32.totalorder %s11, 1
      %s13 = scalar_select %p12, %s11, 1
      %s14 = smul.addr %s13, 8
      %s15 = scalar_lea.vmem %s0, %s14
      %s16 = sadd.s32 0, 0
      %s17 = smul.u32 2, %s16
    $region5: #{tpu_custom_call.1} parent=1 // pred_fallthru
      _
    // Predicated region
    $region6: #{tpu_custom_call.1} parent=1 // pred_check
      _
    $region7: #{tpu_custom_call.1} parent=1 // pred_check_branch
      %19 = sbr.rel (0) target = $region9
    $region8: #{tpu_custom_call.1} parent=1 // pred_region
      _
    $region9: #{tpu_custom_call.1} parent=1 // pred_fallthru
      _
    %s20 = sadd.s32 0, 0
    %s21 = smul.u32 2, %s20
    %p22 = scmp.lt.s32.totalorder %s21, 1
    %s23 = scalar_select %p22, %s21, 1
    %s24 = smul.addr %s23, 8
    %s25 = scalar_lea.vmem %s0, %s24
    %s26 = sadd.s32 0, 0
    %s27 = smul.u32 2, %s26
    %p28 = scmp.lt.s32.totalorder %s27, 1
    %s29 = scalar_select %p28, %s27, 1
    %s30 = smul.addr %s29, 8
    %s31 = scalar_lea.vmem %s0, %s30
    %s32 = sadd.s32 0, 0
    %s33 = smul.u32 2, %s32
    %p34 = scmp.eq.s32.totalorder 0, 0
    // Predicated region
    $region10: #{tpu_custom_call.1} parent=1 // pred_check
      %p35 = pneg %p34
    $region11: #{tpu_custom_call.1} parent=1 // pred_check_branch
      %37 = sbr.rel (%p35) target = $region13
    $region12: #{tpu_custom_call.1} parent=1 // pred_region
      %38 = vst [vmem:[#allocation2] sm:$0xff] 0.0
    $region13: #{tpu_custom_call.1} parent=1 // pred_fallthru
      _
    %v39 = vld [vmem:[%s31] sm:$0xff]
    %v40 = vld [vmem:[%s31 + $0x8] sm:$0xff]
    %s41 = sadd.s32 0, 0
    %s42 = smul.u32 %s41, 16
    %s43 = scalar_lea.vmem %s1, %s42
    %v44 = vld [vmem:[%s43] sm:$0xff]
    %v45 = vld [vmem:[%s43 + $0x8] sm:$0xff]
    %46 = vmax.xlane.f32.xlu0 %v39
    %v47 = vpop.xlane.xlu0 %46
    %48 = vmax.xlane.f32.xlu0 %v40
    %v49 = vpop.xlane.xlu0 %48
    %v50 = vsub.f32 %v39, %v47
    %v51 = vsub.f32 %v40, %v49
    %v52 = vmul.f32 %v50, 1.442695
    %v53 = vpow.pop %v52
    %v54 = vmul.f32 %v51, 1.442695
    %v55 = vpow.pop %v54
    %56 = vadd.xlane.f32.xlu0 %v53
    %v57 = vpop.xlane.xlu0 %56
    %58 = vadd.xlane.f32.xlu0 %v55
    %v59 = vpop.xlane.xlu0 %58
    %v60 = vlog2.pop %v57
    %v61 = vmul.f32 %v60, 0.6931472
    %v62 = vlog2.pop %v59
    %v63 = vmul.f32 %v62, 0.6931472
    %v64 = vadd.f32 %v61, %v47
    %v65 = vadd.f32 %v63, %v49
    %v66 = vlaneseq
    %v67 = vand.u32 %v66, 127
    %68 = vset.pattern.permute.xlu0 0
    %69 = vperm.xlu0 %68, %v44
    %v70 = vpop.permute.xlu0 %69
    %71 = vset.pattern.permute.xlu0 0
    %72 = vperm.xlu0 %71, %v45
    %v73 = vpop.permute.xlu0 %72
    %vm74 = vcmp.eq.s32.totalorder %v67, %v70
    %vm75 = vcmp.eq.s32.totalorder %v67, %v73
    %v76 = vsel %vm74, %v39, 0.0
    %v77 = vsel %vm75, %v40, 0.0
    %78 = vadd.xlane.f32.xlu0 %v76
    %v79 = vpop.xlane.xlu0 %78
    %80 = vadd.xlane.f32.xlu0 %v77
    %v81 = vpop.xlane.xlu0 %80
    %v82 = vld [vmem:[#allocation2] sm:$0xff]
    %vm83 = vcmp.ge.s32.totalorder %v44, 0
    %vm84 = vcmp.ge.s32.totalorder %v45, 0
    %v85 = vsub.f32 %v64, %v79
    %v86 = vsub.f32 %v65, %v81
    %v87 = vsel %vm83, %v85, 0.0
    %v88 = vsel %vm84, %v86, 0.0
    %vm89 = vcmask 7168
    %v90 = vsel %vm89, %v87, 0.0
    %v91 = vsel %vm89, %v88, 0.0
    %v92 = vadd.f32 %v90, %v91
    %93 = vadd.xlane.f32.xlu0 %v92
    %v94 = vpop.xlane.xlu0 %93
    %v95 = vrot.slane %v94, 4
    %v96 = vadd.f32 %v94, %v95
    %v97 = vrot.slane %v96, 2
    %v98 = vadd.f32 %v96, %v97
    %v99 = vrot.slane %v98, 1
    %v100 = vadd.f32 %v98, %v99
    %s101 = vtos %v100
    %v102 = vstv %s101
    %v103 = vadd.f32 %v82, %v102
    %104 = vst [vmem:[#allocation2] sm:$0xff] %v103
    // Predicated region
    $region14: #{tpu_custom_call.1} parent=1 // pred_check
      _
    $region15: #{tpu_custom_call.1} parent=1 // pred_check_branch
      %106 = sbr.rel (0) target = $region17
    $region16: #{tpu_custom_call.1} parent=1 // pred_region
      %s108 = ssub.s32 128, 128
      %109 = vsyncadd [#allocation3], %s108
      %s111 = sshll.u32 [#allocation2], 4
      %s112 = int_to_ptr.vmem [resolvable:$true] %s111
      %114 = dma.vmem_to_hbm [thread:$0]  %s112, 128, %s2, [#allocation3]
    $region17: #{tpu_custom_call.1} parent=1 // pred_fallthru
      _
    // Predicated region
    $region18: #{tpu_custom_call.1} parent=1 // pred_check
      _
    $region19: #{tpu_custom_call.1} parent=1 // pred_check_branch
      %116 = sbr.rel (0) target = $region21
    $region20: #{tpu_custom_call.1} parent=1 // pred_region
      %117 = dma.done [#allocation3], 128
    $region21: #{tpu_custom_call.1} parent=1 // pred_fallthru
      _
    %118 = vsyncpa [#allocation3], 1

</llo_original>
